<compile_context>
chip_gen: v6e
topology: v6e:2x2x1
jax: 0.10.0
libtpu: 0.0.40
codegen_flags: <defaults>
</compile_context>

<pallas_src>
import math

import numpy as np
import jax
import jax.numpy as jnp
from jax.experimental import pallas as pl
from jax.experimental.pallas import tpu as pltpu


def _round_up(x, m):
    return ((x + m - 1) // m) * m


# ----------------------------- Pallas kernel ---------------------------------

def _diffpool_kernel(x_ref, a_ref, s_ref, xo_ref, ao_ref):
    # Batch dim is squeezed by the BlockSpecs: all refs are 2-D.
    x = x_ref[...]        # (N, Fp)   feature columns >= F are zero
    a = a_ref[...]        # (N, N)
    s_raw = s_ref[...]    # (N, Cp)   cluster columns >= C hold -1e30

    # softmax over cluster axis; padded clusters -> exp(~-1e30) == 0, so the
    # normalization over the true C clusters matches dense_diff_pool exactly.
    m = jnp.max(s_raw, axis=-1, keepdims=True)
    e = jnp.exp(s_raw - m)
    denom = jnp.sum(e, axis=-1, keepdims=True)
    s = e * pl.reciprocal(denom, approx=True)          # (N, Cp)

    # x_pool = s^T X : contract the node axis directly (K = N).
    x_pool = jnp.einsum('nc,nf->cf', s, x,
                        preferred_element_type=jnp.float32)   # (Cp, Fp)

    # a_pool = s^T (A s) : both MXU contractions keep K = N.
    a_s = jnp.dot(a, s, preferred_element_type=jnp.float32)   # (N, Cp)
    a_pool = jnp.einsum('nc,nk->ck', s, a_s,
                        preferred_element_type=jnp.float32)   # (Cp, Cp)

    # zero the diagonal (the module zeroes A[i, arange, arange] before
    # thresholding for dense_to_sparse).
    cp = a_pool.shape[-1]
    row = jax.lax.broadcasted_iota(jnp.int32, (cp, cp), 0)
    col = jax.lax.broadcasted_iota(jnp.int32, (cp, cp), 1)
    a_pool = jnp.where(row == col, jnp.float32(0.0), a_pool)

    xo_ref[...] = x_pool
    ao_ref[...] = a_pool


@jax.jit
def diffpool_dense(x_batch, a_batch, s_param):
    """Dense diff-pool hot path on TPU via pallas_call.

    x_batch: (B, N, F) f32, a_batch: (B, N, N) f32, s_param: (B, N, C) f32
    returns x_pool (B, C, F), a_pool (B, C, C) with zeroed diagonal.
    """
    B, N, F = x_batch.shape
    C = s_param.shape[-1]
    Fp = _round_up(F, 128)
    Cp = _round_up(C, 128)

    # Wrapper-side padding so all kernel I/O is lane-dense (last dim % 128 == 0):
    #   feature columns -> zero-pad, cluster columns -> -1e30 (zero softmax
    #   weight), sliced off after the kernel.
    x_p = jnp.zeros((B, N, Fp), jnp.float32).at[:, :, :F].set(
        x_batch.astype(jnp.float32))
    a_p = a_batch.astype(jnp.float32)
    s_p = jnp.full((B, N, Cp), -1e30, jnp.float32).at[:, :, :C].set(
        s_param.astype(jnp.float32))

    grid_spec = pltpu.PrefetchScalarGridSpec(
        num_scalar_prefetch=0,
        grid=(B,),
        in_specs=[
            pl.BlockSpec((None, N, Fp), lambda b: (b, 0, 0)),
            pl.BlockSpec((None, N, N), lambda b: (b, 0, 0)),
            pl.BlockSpec((None, N, Cp), lambda b: (b, 0, 0)),
        ],
        out_specs=[
            pl.BlockSpec((None, Cp, Fp), lambda b: (b, 0, 0)),
            pl.BlockSpec((None, Cp, Cp), lambda b: (b, 0, 0)),
        ],
    )

    # VMEM guard when N (max_nodes_num) scales: the (N, N) adjacency block is
    # the dominant term and is double-buffered by the pipeline.
    block_bytes = 4 * (N * Fp + N * N + N * Cp + Cp * Fp + Cp * Cp)
    vmem_limit = None
    if 3 * block_bytes > 32 * 1024 * 1024:
        # TODO(synk): for very large N, tile the node contraction (extra
        # 'arbitrary' grid axis + VMEM accumulator) instead of only raising the
        # scoped VMEM limit; v7x has only 64 MiB physical VMEM.
        vmem_limit = min(64 * 1024 * 1024, 3 * block_bytes)

    x_pool_p, a_pool_p = pl.pallas_call(
        _diffpool_kernel,
        out_shape=(
            jax.ShapeDtypeStruct((B, Cp, Fp), jnp.float32),
            jax.ShapeDtypeStruct((B, Cp, Cp), jnp.float32),
        ),
        grid_spec=grid_spec,
        compiler_params=pltpu.CompilerParams(
            dimension_semantics=("parallel",),
            vmem_limit_bytes=vmem_limit),
    )(x_p, a_p, s_p)

    # Slice padding back off in plain JAX (fused under jit).
    return x_pool_p[:, :C, :F], a_pool_p[:, :C, :C]


# ------------------------------ glue (plain JAX / NumPy) ---------------------

def glorot_init(key, shape):
    stdv = math.sqrt(6.0 / (shape[0] + shape[1]))
    return jax.random.uniform(key, shape, jnp.float32, minval=-stdv, maxval=stdv)


def to_dense_batch_np(x, batch, batch_size, max_nodes_num):
    """NumPy equivalent of torch_geometric.to_dense_batch + zero padding."""
    F = x.shape[1]
    X_batch = np.zeros((batch_size, max_nodes_num, F), dtype=np.float32)
    for b in range(int(batch.max()) + 1):
        idx = np.where(batch == b)[0]
        X_batch[b, :len(idx), :] = x[idx]
    return X_batch


def to_dense_adj_np(edge_index, batch, num_nodes, batch_size, max_nodes_num):
    """Dense per-graph adjacency, matching the module's sparse->dense loop."""
    A_p = np.zeros((num_nodes, num_nodes), dtype=np.float32)
    A_p[edge_index[0], edge_index[1]] = 1.0
    A_batch = np.zeros((batch_size, max_nodes_num, max_nodes_num), dtype=np.float32)
    for b in range(int(batch.max()) + 1):
        idx = np.where(batch == b)[0]
        n = len(idx)
        A_batch[b, :n, :n] = A_p[np.ix_(idx, idx)]
    return A_batch


def diffpool_sparse_forward(x, edge_index, batch, S, batch_size, max_nodes_num):
    """Full forward matching DiffPoolSparse.forward semantics."""
    x = np.asarray(x)
    edge_index = np.asarray(edge_index)
    batch = np.asarray(batch)
    real_batch_size = int(batch.max()) + 1
    C = S.shape[-1]

    X_batch = to_dense_batch_np(x, batch, batch_size, max_nodes_num)
    A_batch = to_dense_adj_np(edge_index, batch, x.shape[0],
                              batch_size, max_nodes_num)

    x_pool, a_pool = diffpool_dense(jnp.asarray(X_batch), jnp.asarray(A_batch), S)
    # Single device sync + single host transfer for both outputs.
    x_pool, a_pool = jax.block_until_ready((x_pool, a_pool))
    x_pool_np, a_pool_np = jax.device_get((x_pool, a_pool))

    # x_coarse / batch_coarse: concat of per-graph pooled features
    x_coarse = x_pool_np[:real_batch_size].reshape(real_batch_size * C, -1)
    batch_coarse = np.repeat(np.arange(real_batch_size, dtype=np.int64), C)

    # edge_index_coarse: threshold + dense_to_sparse on pooled adjacency.
    # Diagonal was zeroed in-kernel; thresholding & nonzero stay host-side
    # (data-dependent output size).
    # TODO(synk): dense_to_sparse has no fixed-shape Pallas equivalent.
    ei_list = []
    for i in range(real_batch_size):
        r, cidx = np.nonzero(a_pool_np[i] > 0)
        ei_list.append(np.stack([r, cidx]).astype(np.int64) + C * i)
    edge_index_coarse = np.concatenate(ei_list, axis=-1)

    return x_coarse, edge_index_coarse, batch_coarse


# ----------------------------------- main ------------------------------------

if __name__ == "__main__":
    batch_size = 2          # B
    max_nodes_num = 16      # N
    clusters_num = 4        # C
    feat_dim = 8            # F

    key = jax.random.PRNGKey(0)
    k_s, k_x = jax.random.split(key)

    # parameter S (glorot over first two dims, like the torch init)
    S = glorot_init(k_s, (batch_size, max_nodes_num, clusters_num))

    # deterministic small sparse graph batch: graph0 has 10 nodes, graph1 has 12
    n0, n1 = 10, 12
    num_nodes = n0 + n1
    x = np.asarray(jax.random.normal(k_x, (num_nodes, feat_dim), jnp.float32))
    batch = np.array([0] * n0 + [1] * n1, dtype=np.int64)

    edges = []
    for i in range(n0 - 1):                 # chain in graph 0 (both directions)
        edges.append((i, i + 1)); edges.append((i + 1, i))
    for i in range(n1 - 1):                 # chain in graph 1
        edges.append((n0 + i, n0 + i + 1)); edges.append((n0 + i + 1, n0 + i))
    edge_index = np.array(edges, dtype=np.int64).T  # (2, E)

    x_coarse, edge_index_coarse, batch_coarse = diffpool_sparse_forward(
        x, edge_index, batch, S, batch_size, max_nodes_num)

    assert x_coarse.shape == (batch_size * clusters_num, feat_dim)
    assert batch_coarse.shape == (batch_size * clusters_num,)
    assert edge_index_coarse.shape[0] == 2
    assert np.isfinite(x_coarse).all()

    print("KERNEL_OK")
</pallas_src>

<mosaic_0001>
module attributes {stable_mosaic.version = 11 : i64} {
  func.func @_diffpool_kernel(%arg0: i32, %arg1: memref<1x16x128xf32, #tpu.memory_space<vmem>>, %arg2: memref<1x16x16xf32, #tpu.memory_space<vmem>>, %arg3: memref<1x16x128xf32, #tpu.memory_space<vmem>>, %arg4: memref<1x128x128xf32, #tpu.memory_space<vmem>>, %arg5: memref<1x128x128xf32, #tpu.memory_space<vmem>>) attributes {dimension_semantics = [#tpu.dimension_semantics<parallel>], iteration_bounds = array<i64: 2>, scalar_prefetch = 0 : i64, scratch_operands = 0 : i64, tpu.core_type = #tpu.core_type<tc>, window_params = [{transform_indices = @transform_0, window_bounds = array<i64: 1, 16, 128>}, {transform_indices = @transform_1, window_bounds = array<i64: 1, 16, 16>}, {transform_indices = @transform_2, window_bounds = array<i64: 1, 16, 128>}, {transform_indices = @transform_3, window_bounds = array<i64: 1, 128, 128>}, {transform_indices = @transform_4, window_bounds = array<i64: 1, 128, 128>}]} {
    %c0 = arith.constant 0 : index
    %c0_0 = arith.constant 0 : index
    %c0_1 = arith.constant 0 : index
    %0 = vector.load %arg1[%c0, %c0_0, %c0_1] : memref<1x16x128xf32, #tpu.memory_space<vmem>>, vector<1x16x128xf32>
    %1 = vector.shape_cast %0 : vector<1x16x128xf32> to vector<16x128xf32>
    %c0_2 = arith.constant 0 : index
    %c0_3 = arith.constant 0 : index
    %c0_4 = arith.constant 0 : index
    %2 = vector.load %arg2[%c0_2, %c0_3, %c0_4] : memref<1x16x16xf32, #tpu.memory_space<vmem>>, vector<1x16x16xf32>
    %3 = vector.shape_cast %2 : vector<1x16x16xf32> to vector<16x16xf32>
    %c0_5 = arith.constant 0 : index
    %c0_6 = arith.constant 0 : index
    %c0_7 = arith.constant 0 : index
    %4 = vector.load %arg3[%c0_5, %c0_6, %c0_7] : memref<1x16x128xf32, #tpu.memory_space<vmem>>, vector<1x16x128xf32>
    %5 = vector.shape_cast %4 : vector<1x16x128xf32> to vector<16x128xf32>
    %cst = arith.constant dense<0xFF800000> : vector<16xf32>
    %6 = vector.multi_reduction <maximumf>, %5, %cst [1] : vector<16x128xf32> to vector<16xf32>
    %7 = vector.shape_cast %6 : vector<16xf32> to vector<16x1xf32>
    %8 = vector.broadcast %7 : vector<16x1xf32> to vector<16x128xf32>
    %9 = arith.subf %5, %8 : vector<16x128xf32>
    %10 = math.exp %9 : vector<16x128xf32>
    %cst_8 = arith.constant dense<0.000000e+00> : vector<16xf32>
    %11 = vector.multi_reduction <add>, %10, %cst_8 [1] : vector<16x128xf32> to vector<16xf32>
    %12 = vector.shape_cast %11 : vector<16xf32> to vector<16x1xf32>
    %13 = tpu.reciprocal %12 {approx = true} : vector<16x1xf32> -> vector<16x1xf32>
    %14 = vector.broadcast %13 : vector<16x1xf32> to vector<16x128xf32>
    %15 = arith.mulf %10, %14 : vector<16x128xf32>
    "tpu.trace_start"() <{level = 10 : i32, message = "nc,nf->cf"}> : () -> ()
    %cst_9 = arith.constant dense<0.000000e+00> : vector<128x128xf32>
    %16 = tpu.matmul %15, %1, %cst_9 {dimension_numbers = #tpu.dot_dimension_numbers<[0], [0], [1], [1], [0, 1, 1, 1], [], []>} : vector<16x128xf32>, vector<16x128xf32>, vector<128x128xf32> -> vector<128x128xf32>
    "tpu.trace_stop"() : () -> ()
    %cst_10 = arith.constant dense<0.000000e+00> : vector<16x128xf32>
    %17 = tpu.matmul %3, %15, %cst_10 {dimension_numbers = #tpu.dot_dimension_numbers<[1], [0], [0], [1], [0, 0, 1, 1], [], []>} : vector<16x16xf32>, vector<16x128xf32>, vector<16x128xf32> -> vector<16x128xf32>
    "tpu.trace_start"() <{level = 10 : i32, message = "nc,nk->ck"}> : () -> ()
    %cst_11 = arith.constant dense<0.000000e+00> : vector<128x128xf32>
    %18 = tpu.matmul %15, %17, %cst_11 {dimension_numbers = #tpu.dot_dimension_numbers<[0], [0], [1], [1], [0, 1, 1, 1], [], []>} : vector<16x128xf32>, vector<16x128xf32>, vector<128x128xf32> -> vector<128x128xf32>
    "tpu.trace_stop"() : () -> ()
    %19 = tpu.iota {dimensions = array<i32: 0>} : vector<128x128xi32>
    %20 = tpu.iota {dimensions = array<i32: 1>} : vector<128x128xi32>
    %21 = arith.cmpi eq, %19, %20 : vector<128x128xi32>
    %cst_12 = arith.constant 0.000000e+00 : f32
    %22 = vector.broadcast %cst_12 : f32 to vector<128x128xf32>
    %23 = arith.select %21, %22, %18 : vector<128x128xi1>, vector<128x128xf32>
    %c0_13 = arith.constant 0 : index
    %c0_14 = arith.constant 0 : index
    %c0_15 = arith.constant 0 : index
    %24 = vector.load %arg4[%c0_13, %c0_14, %c0_15] : memref<1x128x128xf32, #tpu.memory_space<vmem>>, vector<1x128x128xf32>
    %25 = vector.shape_cast %24 : vector<1x128x128xf32> to vector<128x128xf32>
    %26 = vector.shape_cast %16 : vector<128x128xf32> to vector<1x128x128xf32>
    tpu.vector_store %arg4[%c0_13, %c0_14, %c0_15], %26 {strides = array<i32>} : memref<1x128x128xf32, #tpu.memory_space<vmem>>, vector<1x128x128xf32>,
    %c0_16 = arith.constant 0 : index
    %c0_17 = arith.constant 0 : index
    %c0_18 = arith.constant 0 : index
    %27 = vector.load %arg5[%c0_16, %c0_17, %c0_18] : memref<1x128x128xf32, #tpu.memory_space<vmem>>, vector<1x128x128xf32>
    %28 = vector.shape_cast %27 : vector<1x128x128xf32> to vector<128x128xf32>
    %29 = vector.shape_cast %23 : vector<128x128xf32> to vector<1x128x128xf32>
    tpu.vector_store %arg5[%c0_16, %c0_17, %c0_18], %29 {strides = array<i32>} : memref<1x128x128xf32, #tpu.memory_space<vmem>>, vector<1x128x128xf32>,
    return
  }
  func.func @transform_0(%arg0: i32) -> (i32, i32, i32) {
    %c0_i32 = arith.constant 0 : i32
    %c0_i32_0 = arith.constant 0 : i32
    %c0_i32_1 = arith.constant 0 : i32
    return %arg0, %c0_i32, %c0_i32_0 : i32, i32, i32
  }
  func.func @transform_1(%arg0: i32) -> (i32, i32, i32) {
    %c0_i32 = arith.constant 0 : i32
    %c0_i32_0 = arith.constant 0 : i32
    %c0_i32_1 = arith.constant 0 : i32
    return %arg0, %c0_i32, %c0_i32_0 : i32, i32, i32
  }
  func.func @transform_2(%arg0: i32) -> (i32, i32, i32) {
    %c0_i32 = arith.constant 0 : i32
    %c0_i32_0 = arith.constant 0 : i32
    %c0_i32_1 = arith.constant 0 : i32
    return %arg0, %c0_i32, %c0_i32_0 : i32, i32, i32
  }
  func.func @transform_3(%arg0: i32) -> (i32, i32, i32) {
    %c0_i32 = arith.constant 0 : i32
    %c0_i32_0 = arith.constant 0 : i32
    %c0_i32_1 = arith.constant 0 : i32
    return %arg0, %c0_i32, %c0_i32_0 : i32, i32, i32
  }
  func.func @transform_4(%arg0: i32) -> (i32, i32, i32) {
    %c0_i32 = arith.constant 0 : i32
    %c0_i32_0 = arith.constant 0 : i32
    %c0_i32_1 = arith.constant 0 : i32
    return %arg0, %c0_i32, %c0_i32_0 : i32, i32, i32
  }
}

</mosaic_0001>

<llo_original>
// kernel: diffpool_dense.1
$region0: #{diffpool_dense.1}
  #allocation0 [shape = 'u32[]', space=smem, size = 0x4, offset = 0x4, fixed_abs, tag = 'smem constant byte address 0x4 - core index']
  #allocation1 [shape = 'u32[144,128]{1,0:T(1,128)}', space=vmem, size = 0x12000, scoped, tag = 'internal scratch']
  %s0 = inlined_call_operand.vmem [shape: f32[2,16,128], index: 0, kind: input, shape index: {}]
  %s1 = inlined_call_operand.vmem [shape: f32[2,16,16], index: 1, kind: input, shape index: {}]
  %s2 = inlined_call_operand.vmem [shape: f32[2,16,128], index: 2, kind: input, shape index: {}]
  %s3 = inlined_call_operand.vmem [shape: f32[2,128,128], index: 3, kind: output, shape index: {0}]
  %s4 = inlined_call_operand.vmem [shape: f32[2,128,128], index: 4, kind: output, shape index: {1}]
  %5 = xla_tuple %s3, %s4
  %s6 = sld [smem:[#allocation0]]
  $region53: #{diffpool_dense.1} parent=0
    _
  %s8 = ssub.s32 1, %s6
  %s9 = scalar_select 0, %s8, %s6
  loop: start=0, step=1, limit=4
  $region2: #{diffpool_dense.1} parent=0 // loop_pre_header
    _
  $region3: #{diffpool_dense.1} parent=0 // loop_header
    %s11 = sphi 0, %s15
    %p12 = scmp.ge.s32.totalorder %s11, 4
    %s21 = sphi 0, %s23
    %s24 = sphi 0, %s21
    %s25 = sphi 0, %s24
    %s41 = sphi 0, %s25
    %s47 = sphi 0, %s49
    %s50 = sphi 0, %s47
    %s51 = sphi 0, %s50
    %s67 = sphi 0, %s51
    %s73 = sphi 0, %s75
    %s76 = sphi 0, %s73
    %s77 = sphi 0, %s76
    %s93 = sphi 0, %s77
    %s99 = sphi 0, %s101
    %s102 = sphi 0, %s99
    %s103 = sphi 0, %s102
    %s119 = sphi 0, %s103
    %s125 = sphi 0, %s127
    %s128 = sphi 0, %s125
    %s129 = sphi 0, %s128
    %s145 = sphi 0, %s129
  $region4: #{diffpool_dense.1} parent=0 // loop_header_branch
    %14 = sbr.rel (%p12) target = $region8
  $region5: #{diffpool_dense.1} parent=0 // loop_body
    %s16 = ssub.s32 %s11, 1
    %s17 = ssub.s32 %s11, 2
    %s18 = sadd.s32 %s11, 1
    %s19 = ssub.s32 %s11, %s18
    %p20 = scmp.eq.s32.totalorder %s19, 0
    %s22 = sadd.s32 %s21, 1
    %s23 = scalar_select %p20, %s21, %s22
    %p26 = pneg %p20
    %p27 = scmp.eq.s32.totalorder %s11, 1
    %p28 = por %p26, %p27
    %p29 = scmp.ne.s32.totalorder %s21, %s24
    %p30 = scmp.eq.s32.totalorder %s11, 0
    %p31 = por %p29, %p30
    %p32 = scmp.ne.s32.totalorder %s21, %s24
    %p33 = scmp.eq.s32.totalorder %s16, 1
    %p34 = por %p32, %p33
    %p35 = scmp.ne.s32.totalorder %s24, %s25
    %p36 = scmp.eq.s32.totalorder %s16, 0
    %p37 = por %p35, %p36
    %p38 = scmp.ne.s32.totalorder %s24, %s25
    %p39 = scmp.eq.s32.totalorder %s17, 1
    %p40 = por %p38, %p39
    %p42 = scmp.ne.s32.totalorder %s25, %s41
    %p43 = scmp.eq.s32.totalorder %s17, 0
    %p44 = por %p42, %p43
    %s45 = ssub.s32 %s11, %s18
    %p46 = scmp.eq.s32.totalorder %s45, 0
    %s48 = sadd.s32 %s47, 1
    %s49 = scalar_select %p46, %s47, %s48
    %p52 = pneg %p46
    %p53 = scmp.eq.s32.totalorder %s11, 1
    %p54 = por %p52, %p53
    %p55 = scmp.ne.s32.totalorder %s47, %s50
    %p56 = scmp.eq.s32.totalorder %s11, 0
    %p57 = por %p55, %p56
    %p58 = scmp.ne.s32.totalorder %s47, %s50
    %p59 = scmp.eq.s32.totalorder %s16, 1
    %p60 = por %p58, %p59
    %p61 = scmp.ne.s32.totalorder %s50, %s51
    %p62 = scmp.eq.s32.totalorder %s16, 0
    %p63 = por %p61, %p62
    %p64 = scmp.ne.s32.totalorder %s50, %s51
    %p65 = scmp.eq.s32.totalorder %s17, 1
    %p66 = por %p64, %p65
    %p68 = scmp.ne.s32.totalorder %s51, %s67
    %p69 = scmp.eq.s32.totalorder %s17, 0
    %p70 = por %p68, %p69
    %s71 = ssub.s32 %s11, %s18
    %p72 = scmp.eq.s32.totalorder %s71, 0
    %s74 = sadd.s32 %s73, 1
    %s75 = scalar_select %p72, %s73, %s74
    %p78 = pneg %p72
    %p79 = scmp.eq.s32.totalorder %s11, 1
    %p80 = por %p78, %p79
    %p81 = scmp.ne.s32.totalorder %s73, %s76
    %p82 = scmp.eq.s32.totalorder %s11, 0
    %p83 = por %p81, %p82
    %p84 = scmp.ne.s32.totalorder %s73, %s76
    %p85 = scmp.eq.s32.totalorder %s16, 1
    %p86 = por %p84, %p85
    %p87 = scmp.ne.s32.totalorder %s76, %s77
    %p88 = scmp.eq.s32.totalorder %s16, 0
    %p89 = por %p87, %p88
    %p90 = scmp.ne.s32.totalorder %s76, %s77
    %p91 = scmp.eq.s32.totalorder %s17, 1
    %p92 = por %p90, %p91
    %p94 = scmp.ne.s32.totalorder %s77, %s93
    %p95 = scmp.eq.s32.totalorder %s17, 0
    %p96 = por %p94, %p95
    %s97 = ssub.s32 %s11, %s18
    %p98 = scmp.eq.s32.totalorder %s97, 0
    %s100 = sadd.s32 %s99, 1
    %s101 = scalar_select %p98, %s99, %s100
    %p104 = pneg %p98
    %p105 = scmp.eq.s32.totalorder %s11, 1
    %p106 = por %p104, %p105
    %p107 = scmp.ne.s32.totalorder %s99, %s102
    %p108 = scmp.eq.s32.totalorder %s11, 0
    %p109 = por %p107, %p108
    %p110 = scmp.ne.s32.totalorder %s99, %s102
    %p111 = scmp.eq.s32.totalorder %s16, 1
    %p112 = por %p110, %p111
    %p113 = scmp.ne.s32.totalorder %s102, %s103
    %p114 = scmp.eq.s32.totalorder %s16, 0
    %p115 = por %p113, %p114
    %p116 = scmp.ne.s32.totalorder %s102, %s103
    %p117 = scmp.eq.s32.totalorder %s17, 1
    %p118 = por %p116, %p117
    %p120 = scmp.ne.s32.totalorder %s103, %s119
    %p121 = scmp.eq.s32.totalorder %s17, 0
    %p122 = por %p120, %p121
    %s123 = ssub.s32 %s11, %s18
    %p124 = scmp.eq.s32.totalorder %s123, 0
    %s126 = sadd.s32 %s125, 1
    %s127 = scalar_select %p124, %s125, %s126
    %p130 = pneg %p124
    %p131 = scmp.eq.s32.totalorder %s11, 1
    %p132 = por %p130, %p131
    %p133 = scmp.ne.s32.totalorder %s125, %s128
    %p134 = scmp.eq.s32.totalorder %s11, 0
    %p135 = por %p133, %p134
    %p136 = scmp.ne.s32.totalorder %s125, %s128
    %p137 = scmp.eq.s32.totalorder %s16, 1
    %p138 = por %p136, %p137
    %p139 = scmp.ne.s32.totalorder %s128, %s129
    %p140 = scmp.eq.s32.totalorder %s16, 0
    %p141 = por %p139, %p140
    %p142 = scmp.ne.s32.totalorder %s128, %s129
    %p143 = scmp.eq.s32.totalorder %s17, 1
    %p144 = por %p142, %p143
    %p146 = scmp.ne.s32.totalorder %s129, %s145
    %p147 = scmp.eq.s32.totalorder %s17, 0
    %p148 = por %p146, %p147
    %p149 = scmp.le.s32.totalorder 1, %s11
    %p150 = scmp.lt.s32.totalorder %s11, 3
    %p151 = pnand %p149, %p150
    %p152 = pneg %p151
    // Predicated region
    $region9: #{diffpool_dense.1} parent=5 // pred_check
      _
    $region10: #{diffpool_dense.1} parent=5 // pred_check_branch
      %154 = sbr.rel (%p151) target = $region12
    $region11: #{diffpool_dense.1} parent=5 // pred_region
      %s155 = ssub.s32 %s11, 1
    $region12: #{diffpool_dense.1} parent=5 // pred_fallthru
      _
    %p156 = scmp.lt.s32.totalorder %s11, 2
    // Predicated region
    $region13: #{diffpool_dense.1} parent=5 // pred_check
      %p157 = pneg %p156
    $region14: #{diffpool_dense.1} parent=5 // pred_check_branch
      %159 = sbr.rel (%p157) target = $region16
    $region15: #{diffpool_dense.1} parent=5 // pred_region
      // Predicated region
      $region17: #{diffpool_dense.1} parent=15 // pred_check
        %p160 = pneg %p31
      $region18: #{diffpool_dense.1} parent=15 // pred_check_branch
        %162 = sbr.rel (%p160) target = $region20
      $region19: #{diffpool_dense.1} parent=15 // pred_region
        %p163 = scmp.lt.s32.totalorder %s11, 1
        %s164 = scalar_select %p163, %s11, 1
        %s165 = smul.addr %s164, 2
        %s166 = smul.addr %s165, 8
        %s167 = scalar_lea.vmem %s0, %s166
      $region20: #{diffpool_dense.1} parent=15 // pred_fallthru
        _
      // Predicated region
      $region21: #{diffpool_dense.1} parent=15 // pred_check
        %p168 = pneg %p57
      $region22: #{diffpool_dense.1} parent=15 // pred_check_branch
        %170 = sbr.rel (%p168) target = $region24
      $region23: #{diffpool_dense.1} parent=15 // pred_region
        %p171 = scmp.lt.s32.totalorder %s11, 1
        %s172 = scalar_select %p171, %s11, 1
        %s173 = smul.addr %s172, 2
        %s174 = smul.addr %s173, 8
        %s175 = scalar_lea.vmem %s1, %s174
      $region24: #{diffpool_dense.1} parent=15 // pred_fallthru
        _
      // Predicated region
      $region25: #{diffpool_dense.1} parent=15 // pred_check
        %p176 = pneg %p83
      $region26: #{diffpool_dense.1} parent=15 // pred_check_branch
        %178 = sbr.rel (%p176) target = $region28
      $region27: #{diffpool_dense.1} parent=15 // pred_region
        %p179 = scmp.lt.s32.totalorder %s11, 1
        %s180 = scalar_select %p179, %s11, 1
        %s181 = smul.addr %s180, 2
        %s182 = smul.addr %s181, 8
        %s183 = scalar_lea.vmem %s2, %s182
      $region28: #{diffpool_dense.1} parent=15 // pred_fallthru
        _
    $region16: #{diffpool_dense.1} parent=5 // pred_fallthru
      _
    %p184 = scmp.le.s32.totalorder 1, %s11
    %p185 = scmp.lt.s32.totalorder %s11, 3
    %p186 = pnand %p184, %p185
    %p187 = pneg %p186
    // Predicated region
    $region29: #{diffpool_dense.1} parent=5 // pred_check
      _
    $region30: #{diffpool_dense.1} parent=5 // pred_check_branch
      %189 = sbr.rel (%p186) target = $region32
    $region31: #{diffpool_dense.1} parent=5 // pred_region
      %s190 = ssub.s32 %s11, 1
      %p191 = scmp.lt.s32.totalorder %s16, 1
      %s192 = scalar_select %p191, %s16, 1
      %s193 = smul.addr %s192, 2
      %s194 = smul.addr %s193, 8
      %s195 = scalar_lea.vmem %s0, %s194
      %p196 = pneg %p37
      %p197 = pneg %p34
      %p198 = scmp.lt.s32.totalorder %s16, 1
      %s199 = scalar_select %p198, %s16, 1
      %s200 = smul.addr %s199, 2
      %s201 = smul.addr %s200, 8
      %s202 = scalar_lea.vmem %s1, %s201
      %p203 = pneg %p63
      %p204 = pneg %p60
      %p205 = scmp.lt.s32.totalorder %s16, 1
      %s206 = scalar_select %p205, %s16, 1
      %s207 = smul.addr %s206, 2
      %s208 = smul.addr %s207, 8
      %s209 = scalar_lea.vmem %s2, %s208
      %p210 = pneg %p89
      %p211 = pneg %p86
      %p212 = pneg %p115
      %p213 = pneg %p112
      %p214 = scmp.lt.s32.totalorder %s16, 1
      %s215 = scalar_select %p214, %s16, 1
      %s216 = smul.addr %s215, 16
      %s217 = smul.addr %s216, 8
      %s218 = scalar_lea.vmem %s3, %s217
      %p219 = pneg %p141
      %p220 = pneg %p138
      %p221 = scmp.lt.s32.totalorder %s16, 1
      %s222 = scalar_select %p221, %s16, 1
      %s223 = smul.addr %s222, 16
      %s224 = smul.addr %s223, 8
      %s225 = scalar_lea.vmem %s4, %s224
      %p226 = scmp.lt.s32.totalorder %s16, 1
      %s227 = scalar_select %p226, %s16, 1
      %s228 = smul.addr %s227, 2
      %s229 = smul.addr %s228, 8
      %s230 = scalar_lea.vmem %s0, %s229
      %p231 = scmp.lt.s32.totalorder %s16, 1
      %s232 = scalar_select %p231, %s16, 1
      %s233 = smul.addr %s232, 2
      %s234 = smul.addr %s233, 8
      %s235 = scalar_lea.vmem %s1, %s234
      %p236 = scmp.lt.s32.totalorder %s16, 1
      %s237 = scalar_select %p236, %s16, 1
      %s238 = smul.addr %s237, 2
      %s239 = smul.addr %s238, 8
      %s240 = scalar_lea.vmem %s2, %s239
      %p241 = scmp.lt.s32.totalorder %s16, 1
      %s242 = scalar_select %p241, %s16, 1
      %s243 = smul.addr %s242, 16
      %s244 = smul.addr %s243, 8
      %s245 = scalar_lea.vmem %s3, %s244
      %p246 = scmp.lt.s32.totalorder %s16, 1
      %s247 = scalar_select %p246, %s16, 1
      %s248 = smul.addr %s247, 16
      %s249 = smul.addr %s248, 8
      %s250 = scalar_lea.vmem %s4, %s249
      %v251 = vld [vmem:[%s230] sm:$0xff]
      %v252 = vld [vmem:[%s230 + $0x8] sm:$0xff]
      %v253 = vld [vmem:[%s235] sm:$0xff]
      %v254 = vld [vmem:[%s235 + $0x8] sm:$0xff]
      %v255 = vld [vmem:[%s240] sm:$0xff]
      %v256 = vld [vmem:[%s240 + $0x8] sm:$0xff]
      %257 = vmax.xlane.f32.xlu0 %v255
      %v258 = vpop.xlane.xlu0 %257
      %259 = vmax.xlane.f32.xlu0 %v256
      %v260 = vpop.xlane.xlu0 %259
      %v261 = vsub.f32 %v255, %v258
      %v262 = vsub.f32 %v256, %v260
      %v263 = vmul.f32 %v261, 1.442695
      %v264 = vpow.pop %v263
      %v265 = vmul.f32 %v262, 1.442695
      %v266 = vpow.pop %v265
      %267 = vadd.xlane.f32.xlu0 %v264
      %v268 = vpop.xlane.xlu0 %267
      %269 = vadd.xlane.f32.xlu0 %v266
      %v270 = vpop.xlane.xlu0 %269
      %v271 = vrcp.pop %v268
      %v272 = vrcp.pop %v270
      %v273 = vmul.f32 %v264, %v271
      %v274 = vmul.f32 %v266, %v272
      %275 = vxpose.xlu0.b32.start [1/16] %v273, 128
      %276 = vxpose.xlu0.b32.cont [2/16] %v274, 128
      %277 = vxpose.xlu0.b32.cont [3/16] 0.0, 128
      %278 = vxpose.xlu0.b32.cont [4/16] 0.0, 128
      %279 = vxpose.xlu0.b32.cont [5/16] 0.0, 128
      %280 = vxpose.xlu0.b32.cont [6/16] 0.0, 128
      %281 = vxpose.xlu0.b32.cont [7/16] 0.0, 128
      %282 = vxpose.xlu0.b32.cont [8/16] 0.0, 128
      %283 = vxpose.xlu0.b32.cont [9/16] 0.0, 128
      %284 = vxpose.xlu0.b32.cont [10/16] 0.0, 128
      %285 = vxpose.xlu0.b32.cont [11/16] 0.0, 128
      %286 = vxpose.xlu0.b32.cont [12/16] 0.0, 128
      %287 = vxpose.xlu0.b32.cont [13/16] 0.0, 128
      %288 = vxpose.xlu0.b32.cont [14/16] 0.0, 128
      %289 = vxpose.xlu0.b32.cont [15/16] 0.0, 128
      %290 = vxpose.xlu0.b32.end [16/16] 0.0, 128
      %v291 = vpop.trf.xlu0
      %v292 = vpop.trf.xlu0
      %v293 = vpop.trf.xlu0
      %v294 = vpop.trf.xlu0
      %v295 = vpop.trf.xlu0
      %v296 = vpop.trf.xlu0
      %v297 = vpop.trf.xlu0
      %v298 = vpop.trf.xlu0
      %v299 = vpop.trf.xlu0
      %v300 = vpop.trf.xlu0
      %v301 = vpop.trf.xlu0
      %v302 = vpop.trf.xlu0
      %v303 = vpop.trf.xlu0
      %v304 = vpop.trf.xlu0
      %v305 = vpop.trf.xlu0
      %v306 = vpop.trf.xlu0
      %vm307 = vcmask 130048
      %v309 = vsel %vm307, %v291, 0
      %v312 = vsel %vm307, %v292, 0
      %v315 = vsel %vm307, %v293, 0
      %v318 = vsel %vm307, %v294, 0
      %v321 = vsel %vm307, %v295, 0
      %v324 = vsel %vm307, %v296, 0
      %v327 = vsel %vm307, %v297, 0
      %v330 = vsel %vm307, %v298, 0
      %v333 = vsel %vm307, %v299, 0
      %v336 = vsel %vm307, %v300, 0
      %v339 = vsel %vm307, %v301, 0
      %v342 = vsel %vm307, %v302, 0
      %v345 = vsel %vm307, %v303, 0
      %v348 = vsel %vm307, %v304, 0
      %v351 = vsel %vm307, %v305, 0
      %v354 = vsel %vm307, %v306, 0
      %356 = vmatprep.subr.mxu0 0.0
      %357 = vmatpush1.msra.mxu0 0.0
      %358 = vmatprep.subr.mxu0 0.0
      %359 = vmatpush1.msra.mxu0 0.0
      %360 = vmatprep.subr.mxu0 0.0
      %361 = vmatpush1.msra.mxu0 0.0
      %362 = vmatprep.subr.mxu0 0.0
      %363 = vmatpush1.msra.mxu0 0.0
      %364 = vmatprep.subr.mxu0 0.0
      %365 = vmatpush1.msra.mxu0 0.0
      %366 = vmatprep.subr.mxu0 0.0
      %367 = vmatpush1.msra.mxu0 0.0
      %368 = vmatprep.subr.mxu0 0.0
      %369 = vmatpush1.msra.mxu0 0.0
      %370 = vmatprep.subr.mxu0 0.0
      %371 = vmatpush1.msra.mxu0 0.0
      %372 = vmatprep.subr.mxu0 0.0
      %373 = vmatpush1.msra.mxu0 0.0
      %374 = vmatprep.subr.mxu0 0.0
      %375 = vmatpush1.msra.mxu0 0.0
      %376 = vmatprep.subr.mxu0 0.0
      %377 = vmatpush1.msra.mxu0 0.0
      %378 = vmatprep.subr.mxu0 0.0
      %379 = vmatpush1.msra.mxu0 0.0
      %380 = vmatprep.subr.mxu0 0.0
      %381 = vmatpush1.msra.mxu0 0.0
      %382 = vmatprep.subr.mxu0 0.0
      %383 = vmatpush1.msra.mxu0 0.0
      %384 = vmatprep.subr.mxu0 0.0
      %385 = vmatpush1.msra.mxu0 %v252
      %386 = vmatprep.subr.mxu0 0.0
      %387 = vmatpush1.msra.mxu0 %v251
      %388 = vmatprep.subr.mxu0 0.0
      %389 = vmatpush2.msra.mxu0 0.0
      %390 = vmatprep.subr.mxu0 0.0
      %391 = vmatpush2.msra.mxu0 0.0
      %392 = vmatprep.subr.mxu0 0.0
      %393 = vmatpush2.msra.mxu0 0.0
      %394 = vmatprep.subr.mxu0 0.0
      %395 = vmatpush2.msra.mxu0 0.0
      %396 = vmatprep.subr.mxu0 0.0
      %397 = vmatpush2.msra.mxu0 0.0
      %398 = vmatprep.subr.mxu0 0.0
      %399 = vmatpush2.msra.mxu0 0.0
      %400 = vmatprep.subr.mxu0 0.0
      %401 = vmatpush2.msra.mxu0 0.0
      %402 = vmatprep.subr.mxu0 0.0
      %403 = vmatpush2.msra.mxu0 0.0
      %404 = vmatprep.subr.mxu0 0.0
      %405 = vmatpush2.msra.mxu0 0.0
      %406 = vmatprep.subr.mxu0 0.0
      %407 = vmatpush2.msra.mxu0 0.0
      %408 = vmatprep.subr.mxu0 0.0
      %409 = vmatpush2.msra.mxu0 0.0
      %410 = vmatprep.subr.mxu0 0.0
      %411 = vmatpush2.msra.mxu0 0.0
      %412 = vmatprep.subr.mxu0 0.0
      %413 = vmatpush2.msra.mxu0 0.0
      %414 = vmatprep.subr.mxu0 0.0
      %415 = vmatpush2.msra.mxu0 0.0
      %416 = vmatprep.subr.mxu0 0.0
      %417 = vmatpush2.msra.mxu0 0.0
      %418 = vmatprep.subr.mxu0 0.0
      %419 = vmatpush2.msra.mxu0 0.0
      %420 = vmatprep.mubr.f32.mxu0 0.0
      %421 = vmatmul.mubr.f32.gmra.mxu0 %v309
      %v422 = vpop.f32.mrf.mxu0
      %v423 = vadd.f32 0.0, %v422
      %v424 = vpop.f32.mrf.mxu0
      %425 = vmatprep.mubr.f32.mxu0 0.0
      %426 = vmatmul.mubr.f32.gmra.mxu0 %v312
      %v427 = vpop.f32.mrf.mxu0
      %v428 = vadd.f32 0.0, %v427
      %v429 = vpop.f32.mrf.mxu0
      %430 = vmatprep.mubr.f32.mxu0 0.0
      %431 = vmatmul.mubr.f32.gmra.mxu0 %v315
      %v432 = vpop.f32.mrf.mxu0
      %v433 = vadd.f32 0.0, %v432
      %v434 = vpop.f32.mrf.mxu0
      %435 = vmatprep.mubr.f32.mxu0 0.0
      %436 = vmatmul.mubr.f32.gmra.mxu0 %v318
      %v437 = vpop.f32.mrf.mxu0
      %v438 = vadd.f32 0.0, %v437
      %v439 = vpop.f32.mrf.mxu0
      %440 = vmatprep.mubr.f32.mxu0 0.0
      %441 = vmatmul.mubr.f32.gmra.mxu0 %v321
      %v442 = vpop.f32.mrf.mxu0
      %v443 = vadd.f32 0.0, %v442
      %v444 = vpop.f32.mrf.mxu0
      %445 = vmatprep.mubr.f32.mxu0 0.0
      %446 = vmatmul.mubr.f32.gmra.mxu0 %v324
      %v447 = vpop.f32.mrf.mxu0
      %v448 = vadd.f32 0.0, %v447
      %v449 = vpop.f32.mrf.mxu0
      %450 = vmatprep.mubr.f32.mxu0 0.0
      %451 = vmatmul.mubr.f32.gmra.mxu0 %v327
      %v452 = vpop.f32.mrf.mxu0
      %v453 = vadd.f32 0.0, %v452
      %v454 = vpop.f32.mrf.mxu0
      %455 = vmatprep.mubr.f32.mxu0 0.0
      %456 = vmatmul.mubr.f32.gmra.mxu0 %v330
      %v457 = vpop.f32.mrf.mxu0
      %v458 = vadd.f32 0.0, %v457
      %v459 = vpop.f32.mrf.mxu0
      %460 = vmatprep.mubr.f32.mxu0 0.0
      %461 = vmatmul.mubr.f32.gmra.mxu0 %v333
      %v462 = vpop.f32.mrf.mxu0
      %v463 = vadd.f32 0.0, %v462
      %v464 = vpop.f32.mrf.mxu0
      %465 = vmatprep.mubr.f32.mxu0 0.0
      %466 = vmatmul.mubr.f32.gmra.mxu0 %v336
      %v467 = vpop.f32.mrf.mxu0
      %v468 = vadd.f32 0.0, %v467
      %v469 = vpop.f32.mrf.mxu0
      %470 = vmatprep.mubr.f32.mxu0 0.0
      %471 = vmatmul.mubr.f32.gmra.mxu0 %v339
      %v472 = vpop.f32.mrf.mxu0
      %v473 = vadd.f32 0.0, %v472
      %v474 = vpop.f32.mrf.mxu0
      %475 = vmatprep.mubr.f32.mxu0 0.0
      %476 = vmatmul.mubr.f32.gmra.mxu0 %v342
      %v477 = vpop.f32.mrf.mxu0
      %v478 = vadd.f32 0.0, %v477
      %v479 = vpop.f32.mrf.mxu0
      %480 = vmatprep.mubr.f32.mxu0 0.0
      %481 = vmatmul.mubr.f32.gmra.mxu0 %v345
      %v482 = vpop.f32.mrf.mxu0
      %v483 = vadd.f32 0.0, %v482
      %v484 = vpop.f32.mrf.mxu0
      %485 = vmatprep.mubr.f32.mxu0 0.0
      %486 = vmatmul.mubr.f32.gmra.mxu0 %v348
      %v487 = vpop.f32.mrf.mxu0
      %v488 = vadd.f32 0.0, %v487
      %v489 = vpop.f32.mrf.mxu0
      %490 = vmatprep.mubr.f32.mxu0 0.0
      %491 = vmatmul.mubr.f32.gmra.mxu0 %v351
      %v492 = vpop.f32.mrf.mxu0
      %v493 = vadd.f32 0.0, %v492
      %v494 = vpop.f32.mrf.mxu0
      %495 = vmatprep.mubr.f32.mxu0 0.0
      %496 = vmatmul.mubr.f32.gmra.mxu0 %v354
      %v497 = vpop.f32.mrf.mxu0
      %v498 = vadd.f32 0.0, %v497
      %v499 = vpop.f32.mrf.mxu0
      %500 = vdwg.mxu0
      %v502 = vsel %vm307, %v253, 0
      %v505 = vsel %vm307, %v254, 0
      %507 = vmatprep.subr.mxu0 0.0
      %508 = vmatpush1.msra.mxu0 0.0
      %509 = vmatprep.subr.mxu0 0.0
      %510 = vmatpush1.msra.mxu0 0.0
      %511 = vmatprep.subr.mxu0 0.0
      %512 = vmatpush1.msra.mxu0 0.0
      %513 = vmatprep.subr.mxu0 0.0
      %514 = vmatpush1.msra.mxu0 0.0
      %515 = vmatprep.subr.mxu0 0.0
      %516 = vmatpush1.msra.mxu0 0.0
      %517 = vmatprep.subr.mxu0 0.0
      %518 = vmatpush1.msra.mxu0 0.0
      %519 = vmatprep.subr.mxu0 0.0
      %520 = vmatpush1.msra.mxu0 0.0
      %521 = vmatprep.subr.mxu0 0.0
      %522 = vmatpush1.msra.mxu0 0.0
      %523 = vmatprep.subr.mxu0 0.0
      %524 = vmatpush1.msra.mxu0 0.0
      %525 = vmatprep.subr.mxu0 0.0
      %526 = vmatpush1.msra.mxu0 0.0
      %527 = vmatprep.subr.mxu0 0.0
      %528 = vmatpush1.msra.mxu0 0.0
      %529 = vmatprep.subr.mxu0 0.0
      %530 = vmatpush1.msra.mxu0 0.0
      %531 = vmatprep.subr.mxu0 0.0
      %532 = vmatpush1.msra.mxu0 0.0
      %533 = vmatprep.subr.mxu0 0.0
      %534 = vmatpush1.msra.mxu0 0.0
      %535 = vmatprep.subr.mxu0 0.0
      %536 = vmatpush1.msra.mxu0 %v274
      %537 = vmatprep.subr.mxu0 0.0
      %538 = vmatpush1.msra.mxu0 %v273
      %539 = vmatprep.subr.mxu0 0.0
      %540 = vmatpush2.msra.mxu0 0.0
      %541 = vmatprep.subr.mxu0 0.0
      %542 = vmatpush2.msra.mxu0 0.0
      %543 = vmatprep.subr.mxu0 0.0
      %544 = vmatpush2.msra.mxu0 0.0
      %545 = vmatprep.subr.mxu0 0.0
      %546 = vmatpush2.msra.mxu0 0.0
      %547 = vmatprep.subr.mxu0 0.0
      %548 = vmatpush2.msra.mxu0 0.0
      %549 = vmatprep.subr.mxu0 0.0
      %550 = vmatpush2.msra.mxu0 0.0
      %551 = vmatprep.subr.mxu0 0.0
      %552 = vmatpush2.msra.mxu0 0.0
      %553 = vmatprep.subr.mxu0 0.0
      %554 = vmatpush2.msra.mxu0 0.0
      %555 = vmatprep.subr.mxu0 0.0
      %556 = vmatpush2.msra.mxu0 0.0
      %557 = vmatprep.subr.mxu0 0.0
      %558 = vmatpush2.msra.mxu0 0.0
      %559 = vmatprep.subr.mxu0 0.0
      %560 = vmatpush2.msra.mxu0 0.0
      %561 = vmatprep.subr.mxu0 0.0
      %562 = vmatpush2.msra.mxu0 0.0
      %563 = vmatprep.subr.mxu0 0.0
      %564 = vmatpush2.msra.mxu0 0.0
      %565 = vmatprep.subr.mxu0 0.0
      %566 = vmatpush2.msra.mxu0 0.0
      %567 = vmatprep.subr.mxu0 0.0
      %568 = vmatpush2.msra.mxu0 0.0
      %569 = vmatprep.subr.mxu0 0.0
      %570 = vmatpush2.msra.mxu0 0.0
      %571 = vmatprep.mubr.f32.mxu0 0.0
      %572 = vmatmul.mubr.f32.gmra.mxu0 %v502
      %v573 = vpop.f32.mrf.mxu0
      %v574 = vadd.f32 0.0, %v573
      %v575 = vpop.f32.mrf.mxu0
      %576 = vmatprep.mubr.f32.mxu0 0.0
      %577 = vmatmul.mubr.f32.gmra.mxu0 %v505
      %v578 = vpop.f32.mrf.mxu0
      %v579 = vadd.f32 0.0, %v578
      %v580 = vpop.f32.mrf.mxu0
      %581 = vdwg.mxu0
      %582 = vmatprep.subr.mxu0 0.0
      %583 = vmatpush1.msra.mxu0 0.0
      %584 = vmatprep.subr.mxu0 0.0
      %585 = vmatpush1.msra.mxu0 0.0
      %586 = vmatprep.subr.mxu0 0.0
      %587 = vmatpush1.msra.mxu0 0.0
      %588 = vmatprep.subr.mxu0 0.0
      %589 = vmatpush1.msra.mxu0 0.0
      %590 = vmatprep.subr.mxu0 0.0
      %591 = vmatpush1.msra.mxu0 0.0
      %592 = vmatprep.subr.mxu0 0.0
      %593 = vmatpush1.msra.mxu0 0.0
      %594 = vmatprep.subr.mxu0 0.0
      %595 = vmatpush1.msra.mxu0 0.0
      %596 = vmatprep.subr.mxu0 0.0
      %597 = vmatpush1.msra.mxu0 0.0
      %598 = vmatprep.subr.mxu0 0.0
      %599 = vmatpush1.msra.mxu0 0.0
      %600 = vmatprep.subr.mxu0 0.0
      %601 = vmatpush1.msra.mxu0 0.0
      %602 = vmatprep.subr.mxu0 0.0
      %603 = vmatpush1.msra.mxu0 0.0
      %604 = vmatprep.subr.mxu0 0.0
      %605 = vmatpush1.msra.mxu0 0.0
      %606 = vmatprep.subr.mxu0 0.0
      %607 = vmatpush1.msra.mxu0 0.0
      %608 = vmatprep.subr.mxu0 0.0
      %609 = vmatpush1.msra.mxu0 0.0
      %610 = vmatprep.subr.mxu0 0.0
      %611 = vmatpush1.msra.mxu0 %v579
      %612 = vmatprep.subr.mxu0 0.0
      %613 = vmatpush1.msra.mxu0 %v574
      %614 = vmatprep.subr.mxu0 0.0
      %615 = vmatpush2.msra.mxu0 0.0
      %616 = vmatprep.subr.mxu0 0.0
      %617 = vmatpush2.msra.mxu0 0.0
      %618 = vmatprep.subr.mxu0 0.0
      %619 = vmatpush2.msra.mxu0 0.0
      %620 = vmatprep.subr.mxu0 0.0
      %621 = vmatpush2.msra.mxu0 0.0
      %622 = vmatprep.subr.mxu0 0.0
      %623 = vmatpush2.msra.mxu0 0.0
      %624 = vmatprep.subr.mxu0 0.0
      %625 = vmatpush2.msra.mxu0 0.0
      %626 = vmatprep.subr.mxu0 0.0
      %627 = vmatpush2.msra.mxu0 0.0
      %628 = vmatprep.subr.mxu0 0.0
      %629 = vmatpush2.msra.mxu0 0.0
      %630 = vmatprep.subr.mxu0 0.0
      %631 = vmatpush2.msra.mxu0 0.0
      %632 = vmatprep.subr.mxu0 0.0
      %633 = vmatpush2.msra.mxu0 0.0
      %634 = vmatprep.subr.mxu0 0.0
      %635 = vmatpush2.msra.mxu0 0.0
      %636 = vmatprep.subr.mxu0 0.0
      %637 = vmatpush2.msra.mxu0 0.0
      %638 = vmatprep.subr.mxu0 0.0
      %639 = vmatpush2.msra.mxu0 0.0
      %640 = vmatprep.subr.mxu0 0.0
      %641 = vmatpush2.msra.mxu0 0.0
      %642 = vmatprep.subr.mxu0 0.0
      %643 = vmatpush2.msra.mxu0 0.0
      %644 = vmatprep.subr.mxu0 0.0
      %645 = vmatpush2.msra.mxu0 0.0
      %646 = vmatprep.mubr.f32.mxu0 0.0
      %647 = vmatmul.mubr.f32.gmra.mxu0 %v309
      %v648 = vpop.f32.mrf.mxu0
      %v649 = vadd.f32 0.0, %v648
      %v650 = vpop.f32.mrf.mxu0
      %651 = vmatprep.mubr.f32.mxu0 0.0
      %652 = vmatmul.mubr.f32.gmra.mxu0 %v312
      %v653 = vpop.f32.mrf.mxu0
      %v654 = vadd.f32 0.0, %v653
      %v655 = vpop.f32.mrf.mxu0
      %656 = vmatprep.mubr.f32.mxu0 0.0
      %657 = vmatmul.mubr.f32.gmra.mxu0 %v315
      %v658 = vpop.f32.mrf.mxu0
      %v659 = vadd.f32 0.0, %v658
      %v660 = vpop.f32.mrf.mxu0
      %661 = vmatprep.mubr.f32.mxu0 0.0
      %662 = vmatmul.mubr.f32.gmra.mxu0 %v318
      %v663 = vpop.f32.mrf.mxu0
      %v664 = vadd.f32 0.0, %v663
      %v665 = vpop.f32.mrf.mxu0
      %666 = vmatprep.mubr.f32.mxu0 0.0
      %667 = vmatmul.mubr.f32.gmra.mxu0 %v321
      %v668 = vpop.f32.mrf.mxu0
      %v669 = vadd.f32 0.0, %v668
      %v670 = vpop.f32.mrf.mxu0
      %671 = vmatprep.mubr.f32.mxu0 0.0
      %672 = vmatmul.mubr.f32.gmra.mxu0 %v324
      %v673 = vpop.f32.mrf.mxu0
      %v674 = vadd.f32 0.0, %v673
      %v675 = vpop.f32.mrf.mxu0
      %676 = vmatprep.mubr.f32.mxu0 0.0
      %677 = vmatmul.mubr.f32.gmra.mxu0 %v327
      %v678 = vpop.f32.mrf.mxu0
      %v679 = vadd.f32 0.0, %v678
      %v680 = vpop.f32.mrf.mxu0
      %681 = vmatprep.mubr.f32.mxu0 0.0
      %682 = vmatmul.mubr.f32.gmra.mxu0 %v330
      %v683 = vpop.f32.mrf.mxu0
      %v684 = vadd.f32 0.0, %v683
      %v685 = vpop.f32.mrf.mxu0
      %686 = vmatprep.mubr.f32.mxu0 0.0
      %687 = vmatmul.mubr.f32.gmra.mxu0 %v333
      %v688 = vpop.f32.mrf.mxu0
      %v689 = vadd.f32 0.0, %v688
      %v690 = vpop.f32.mrf.mxu0
      %691 = vmatprep.mubr.f32.mxu0 0.0
      %692 = vmatmul.mubr.f32.gmra.mxu0 %v336
      %v693 = vpop.f32.mrf.mxu0
      %v694 = vadd.f32 0.0, %v693
      %v695 = vpop.f32.mrf.mxu0
      %696 = vmatprep.mubr.f32.mxu0 0.0
      %697 = vmatmul.mubr.f32.gmra.mxu0 %v339
      %v698 = vpop.f32.mrf.mxu0
      %v699 = vadd.f32 0.0, %v698
      %v700 = vpop.f32.mrf.mxu0
      %701 = vmatprep.mubr.f32.mxu0 0.0
      %702 = vmatmul.mubr.f32.gmra.mxu0 %v342
      %v703 = vpop.f32.mrf.mxu0
      %v704 = vadd.f32 0.0, %v703
      %v705 = vpop.f32.mrf.mxu0
      %706 = vmatprep.mubr.f32.mxu0 0.0
      %707 = vmatmul.mubr.f32.gmra.mxu0 %v345
      %v708 = vpop.f32.mrf.mxu0
      %v709 = vadd.f32 0.0, %v708
      %v710 = vpop.f32.mrf.mxu0
      %711 = vmatprep.mubr.f32.mxu0 0.0
      %712 = vmatmul.mubr.f32.gmra.mxu0 %v348
      %v713 = vpop.f32.mrf.mxu0
      %v714 = vadd.f32 0.0, %v713
      %v715 = vpop.f32.mrf.mxu0
      %716 = vmatprep.mubr.f32.mxu0 0.0
      %717 = vmatmul.mubr.f32.gmra.mxu0 %v351
      %v718 = vpop.f32.mrf.mxu0
      %v719 = vadd.f32 0.0, %v718
      %v720 = vpop.f32.mrf.mxu0
      %721 = vmatprep.mubr.f32.mxu0 0.0
      %722 = vmatmul.mubr.f32.gmra.mxu0 %v354
      %v723 = vpop.f32.mrf.mxu0
      %v724 = vadd.f32 0.0, %v723
      %v725 = vpop.f32.mrf.mxu0
      %726 = vdwg.mxu0
      %v727 = vlaneseq
      %v728 = vshrl.u32 %v727, 7
      %v729 = vadd.s32 %v728, 8
      %v730 = vadd.s32 %v728, 16
      %v731 = vadd.s32 %v728, 24
      %v732 = vadd.s32 %v728, 32
      %v733 = vadd.s32 %v728, 40
      %v734 = vadd.s32 %v728, 48
      %v735 = vadd.s32 %v728, 56
      %v736 = vadd.s32 %v728, 64
      %v737 = vadd.s32 %v728, 72
      %v738 = vadd.s32 %v728, 80
      %v739 = vadd.s32 %v728, 88
      %v740 = vadd.s32 %v728, 96
      %v741 = vadd.s32 %v728, 104
      %v742 = vadd.s32 %v728, 112
      %v743 = vadd.s32 %v728, 120
      %v744 = vlaneseq
      %v745 = vand.u32 %v744, 127
      %vm746 = vcmp.eq.s32.totalorder %v728, %v745
      %vm747 = vcmp.eq.s32.totalorder %v729, %v745
      %vm748 = vcmp.eq.s32.totalorder %v730, %v745
      %vm749 = vcmp.eq.s32.totalorder %v731, %v745
      %vm750 = vcmp.eq.s32.totalorder %v732, %v745
      %vm751 = vcmp.eq.s32.totalorder %v733, %v745
      %vm752 = vcmp.eq.s32.totalorder %v734, %v745
      %vm753 = vcmp.eq.s32.totalorder %v735, %v745
      %vm754 = vcmp.eq.s32.totalorder %v736, %v745
      %vm755 = vcmp.eq.s32.totalorder %v737, %v745
      %vm756 = vcmp.eq.s32.totalorder %v738, %v745
      %vm757 = vcmp.eq.s32.totalorder %v739, %v745
      %vm758 = vcmp.eq.s32.totalorder %v740, %v745
      %vm759 = vcmp.eq.s32.totalorder %v741, %v745
      %vm760 = vcmp.eq.s32.totalorder %v742, %v745
      %vm761 = vcmp.eq.s32.totalorder %v743, %v745
      %v762 = vsel %vm746, 0.0, %v649
      %v763 = vsel %vm747, 0.0, %v654
      %v764 = vsel %vm748, 0.0, %v659
      %v765 = vsel %vm749, 0.0, %v664
      %v766 = vsel %vm750, 0.0, %v669
      %v767 = vsel %vm751, 0.0, %v674
      %v768 = vsel %vm752, 0.0, %v679
      %v769 = vsel %vm753, 0.0, %v684
      %v770 = vsel %vm754, 0.0, %v689
      %v771 = vsel %vm755, 0.0, %v694
      %v772 = vsel %vm756, 0.0, %v699
      %v773 = vsel %vm757, 0.0, %v704
      %v774 = vsel %vm758, 0.0, %v709
      %v775 = vsel %vm759, 0.0, %v714
      %v776 = vsel %vm760, 0.0, %v719
      %v777 = vsel %vm761, 0.0, %v724
      %778 = vst [vmem:[%s245] sm:$0xff] %v423
      %779 = vst [vmem:[%s245 + $0x8] sm:$0xff] %v428
      %780 = vst [vmem:[%s245 + $0x10] sm:$0xff] %v433
      %781 = vst [vmem:[%s245 + $0x18] sm:$0xff] %v438
      %782 = vst [vmem:[%s245 + $0x20] sm:$0xff] %v443
      %783 = vst [vmem:[%s245 + $0x28] sm:$0xff] %v448
      %784 = vst [vmem:[%s245 + $0x30] sm:$0xff] %v453
      %785 = vst [vmem:[%s245 + $0x38] sm:$0xff] %v458
      %786 = vst [vmem:[%s245 + $0x40] sm:$0xff] %v463
      %787 = vst [vmem:[%s245 + $0x48] sm:$0xff] %v468
      %788 = vst [vmem:[%s245 + $0x50] sm:$0xff] %v473
      %789 = vst [vmem:[%s245 + $0x58] sm:$0xff] %v478
      %790 = vst [vmem:[%s245 + $0x60] sm:$0xff] %v483
      %791 = vst [vmem:[%s245 + $0x68] sm:$0xff] %v488
      %792 = vst [vmem:[%s245 + $0x70] sm:$0xff] %v493
      %793 = vst [vmem:[%s245 + $0x78] sm:$0xff] %v498
      %794 = vst [vmem:[%s250] sm:$0xff] %v762
      %795 = vst [vmem:[%s250 + $0x8] sm:$0xff] %v763
      %796 = vst [vmem:[%s250 + $0x10] sm:$0xff] %v764
      %797 = vst [vmem:[%s250 + $0x18] sm:$0xff] %v765
      %798 = vst [vmem:[%s250 + $0x20] sm:$0xff] %v766
      %799 = vst [vmem:[%s250 + $0x28] sm:$0xff] %v767
      %800 = vst [vmem:[%s250 + $0x30] sm:$0xff] %v768
      %801 = vst [vmem:[%s250 + $0x38] sm:$0xff] %v769
      %802 = vst [vmem:[%s250 + $0x40] sm:$0xff] %v770
      %803 = vst [vmem:[%s250 + $0x48] sm:$0xff] %v771
      %804 = vst [vmem:[%s250 + $0x50] sm:$0xff] %v772
      %805 = vst [vmem:[%s250 + $0x58] sm:$0xff] %v773
      %806 = vst [vmem:[%s250 + $0x60] sm:$0xff] %v774
      %807 = vst [vmem:[%s250 + $0x68] sm:$0xff] %v775
      %808 = vst [vmem:[%s250 + $0x70] sm:$0xff] %v776
      %809 = vst [vmem:[%s250 + $0x78] sm:$0xff] %v777
      %p810 = scmp.lt.s32.totalorder %s16, 1
      %s811 = scalar_select %p810, %s16, 1
      %s812 = smul.addr %s811, 16
      %s813 = smul.addr %s812, 8
      %s814 = scalar_lea.vmem %s3, %s813
      %p815 = scmp.lt.s32.totalorder %s16, 1
      %s816 = scalar_select %p815, %s16, 1
      %s817 = smul.addr %s816, 16
      %s818 = smul.addr %s817, 8
      %s819 = scalar_lea.vmem %s4, %s818
      // Predicated region
      $region33: #{diffpool_dense.1} parent=31 // pred_check
        %p820 = pneg %p112
      $region34: #{diffpool_dense.1} parent=31 // pred_check_branch
        %822 = sbr.rel (%p820) target = $region36
      $region35: #{diffpool_dense.1} parent=31 // pred_region
        _
      $region36: #{diffpool_dense.1} parent=31 // pred_fallthru
        _
      // Predicated region
      $region37: #{diffpool_dense.1} parent=31 // pred_check
        %p823 = pneg %p138
      $region38: #{diffpool_dense.1} parent=31 // pred_check_branch
        %825 = sbr.rel (%p823) target = $region40
      $region39: #{diffpool_dense.1} parent=31 // pred_region
        _
      $region40: #{diffpool_dense.1} parent=31 // pred_fallthru
        _
    $region32: #{diffpool_dense.1} parent=5 // pred_fallthru
      _
    %p826 = scmp.le.s32.totalorder 2, %s11
    // Predicated region
    $region41: #{diffpool_dense.1} parent=5 // pred_check
      %p827 = pneg %p826
    $region42: #{diffpool_dense.1} parent=5 // pred_check_branch
      %829 = sbr.rel (%p827) target = $region44
    $region43: #{diffpool_dense.1} parent=5 // pred_region
      %s830 = ssub.s32 %s11, 2
      // Predicated region
      $region45: #{diffpool_dense.1} parent=43 // pred_check
        %p831 = pneg %p118
      $region46: #{diffpool_dense.1} parent=43 // pred_check_branch
        %833 = sbr.rel (%p831) target = $region48
      $region47: #{diffpool_dense.1} parent=43 // pred_region
        %p834 = scmp.lt.s32.totalorder %s17, 1
        %s835 = scalar_select %p834, %s17, 1
        %s836 = smul.addr %s835, 16
        %s837 = smul.addr %s836, 8
        %s838 = scalar_lea.vmem %s3, %s837
      $region48: #{diffpool_dense.1} parent=43 // pred_fallthru
        _
      // Predicated region
      $region49: #{diffpool_dense.1} parent=43 // pred_check
        %p839 = pneg %p144
      $region50: #{diffpool_dense.1} parent=43 // pred_check_branch
        %841 = sbr.rel (%p839) target = $region52
      $region51: #{diffpool_dense.1} parent=43 // pred_region
        %p842 = scmp.lt.s32.totalorder %s17, 1
        %s843 = scalar_select %p842, %s17, 1
        %s844 = smul.addr %s843, 16
        %s845 = smul.addr %s844, 8
        %s846 = scalar_lea.vmem %s4, %s845
      $region52: #{diffpool_dense.1} parent=43 // pred_fallthru
        _
    $region44: #{diffpool_dense.1} parent=5 // pred_fallthru
      _
  $region6: #{diffpool_dense.1} parent=0 // loop_footer
    %s15 = sadd.s32 1, %s11
  $region7: #{diffpool_dense.1} parent=0 // loop_footer_branch
    %10 = sbr.rel target = $region3
  $region8: #{diffpool_dense.1} parent=0 // loop_exit
    _

</llo_original>
